<compile_context>
chip_gen: v7x
topology: tpu7x:2x2x1
jax: 0.10.0
libtpu: 0.0.40
codegen_flags: <defaults>
</compile_context>

<pallas_src>
import jax
import jax.numpy as jnp
from jax.experimental import pallas as pl
from jax.experimental.pallas import tpu as pltpu


def _round_up(x: int, m: int) -> int:
    return ((x + m - 1) // m) * m


def _pick_tile(dim: int, target: int, align: int) -> int:
    """Largest multiple of `align` that divides `dim` and is <= target.

    `dim` is assumed to already be a multiple of `align`, so `align` is a
    valid fallback."""
    best = align
    t = align
    limit = min(target, dim)
    while t <= limit:
        if dim % t == 0:
            best = t
        t += align
    return best


# ---------------------------------------------------------------------------
# One-time parameter preparation (hoisted out of the per-call hot path).
# ---------------------------------------------------------------------------
def prepare_params(w_pt, b):
    """Transpose PyTorch weight [OUT, IN] -> [IN, OUT] and zero-pad to 128.

    Returns (w, b) with w of shape [round128(IN), round128(OUT)] and b of
    shape [1, round128(OUT)].  Call once per model, reuse for every forward.
    """
    OUT, IN = w_pt.shape
    INp = _round_up(IN, 128)
    OUTp = _round_up(OUT, 128)
    w = jnp.zeros((INp, OUTp), dtype=w_pt.dtype).at[:IN, :OUT].set(w_pt.T)
    b = jnp.zeros((1, OUTp), dtype=b.dtype).at[:, :OUT].set(jnp.reshape(b, (1, OUT)))
    return w, b


# ---------------------------------------------------------------------------
# Kernels
# ---------------------------------------------------------------------------
def _linear_single_block_kernel(x_ref, w_ref, b_ref, o_ref):
    # Whole problem in one VMEM block: fused matmul + bias + cast.
    o_ref[...] = (
        jnp.dot(x_ref[...], w_ref[...], preferred_element_type=jnp.float32)
        + b_ref[...].astype(jnp.float32)
    ).astype(o_ref.dtype)


def _linear_tiled_kernel(x_ref, w_ref, b_ref, o_ref, acc_ref):
    k = pl.program_id(2)

    @pl.when(k == 0)
    def _():
        acc_ref[...] = jnp.zeros_like(acc_ref)

    acc_ref[...] += jnp.dot(
        x_ref[...], w_ref[...], preferred_element_type=jnp.float32
    )

    @pl.when(k == pl.num_programs(2) - 1)
    def _():
        # Bias added exactly once, in f32, before the final cast/store.
        o_ref[...] = (acc_ref[...] + b_ref[...].astype(jnp.float32)).astype(
            o_ref.dtype
        )


# ---------------------------------------------------------------------------
# Wrapper
# ---------------------------------------------------------------------------
def prn_classification_head(x, w, b, *, out_dim=None, force_tiled=False):
    """y = x @ w + b.

    x: [B, IN] activations (IN <= w.shape[0]; zero-padded internally).
    w: [INp, OUTp] padded weight from prepare_params (i.e. W_pt.T, padded).
    b: [1, OUTp] padded bias from prepare_params.
    out_dim: logical output dim (defaults to OUTp).
    Output dtype == x.dtype; accumulation is f32.
    """
    B, IN = x.shape
    INp, OUTp = w.shape
    assert b.shape == (1, OUTp)
    assert IN <= INp
    OUT = OUTp if out_dim is None else out_dim
    out_dtype = x.dtype

    # Alignment-only padding of the activations (batch to 8, IN to the padded
    # weight's IN).  No rounding up to tile multiples.
    Bp = _round_up(B, 8)
    if (Bp, INp) != (B, IN):
        x = jnp.pad(x, ((0, Bp - B), (0, INp - IN)))

    x_item = jnp.dtype(x.dtype).itemsize
    w_item = jnp.dtype(w.dtype).itemsize
    b_item = jnp.dtype(b.dtype).itemsize
    o_item = jnp.dtype(out_dtype).itemsize

    single_block_bytes = (
        Bp * INp * x_item
        + INp * OUTp * w_item
        + OUTp * b_item
        + Bp * OUTp * (o_item + 4)
    )

    use_fast_path = (
        not force_tiled
        and Bp <= 1024
        and INp <= 4096
        and OUTp <= 4096
        and single_block_bytes <= 12 * 1024 * 1024
    )

    if use_fast_path:
        # -------- Small-problem fast path: one block, no grid, no scratch.
        cost = pl.CostEstimate(
            flops=2 * Bp * INp * OUTp,
            bytes_accessed=(
                Bp * INp * x_item
                + INp * OUTp * w_item
                + OUTp * b_item
                + Bp * OUTp * o_item
            ),
            transcendentals=0,
        )
        y = pl.pallas_call(
            _linear_single_block_kernel,
            out_shape=jax.ShapeDtypeStruct((Bp, OUTp), out_dtype),
            compiler_params=pltpu.CompilerParams(
                vmem_limit_bytes=min(
                    max(2 * single_block_bytes, 8 * 1024 * 1024), 32 * 1024 * 1024
                ),
            ),
            cost_estimate=cost,
        )(x, w, b)
    else:
        # -------- General (M, N, K)-tiled path.
        TM_MAX, TN_MAX, TK_MAX = 512, 1024, 1024
        tm = _pick_tile(Bp, TM_MAX, 8)
        tn = _pick_tile(OUTp, TN_MAX, 128)
        tk = _pick_tile(INp, TK_MAX, 128)

        # If the M/N grid collapses to (1, 1), split M so both v7x TCs work.
        if Bp // tm == 1 and OUTp // tn == 1 and Bp >= 16 and (Bp // 2) % 8 == 0:
            tm = _pick_tile(Bp, Bp // 2, 8)

        grid = (Bp // tm, OUTp // tn, INp // tk)

        # Double-buffered inputs/output + resident f32 accumulator.
        vmem_need = (
            2 * (tm * tk * x_item + tk * tn * w_item + tn * b_item + tm * tn * o_item)
            + tm * tn * 4
        )
        vmem_limit = min(max(int(1.5 * vmem_need), 8 * 1024 * 1024), 32 * 1024 * 1024)

        cost = pl.CostEstimate(
            flops=2 * Bp * INp * OUTp,
            bytes_accessed=(
                Bp * INp * x_item * (OUTp // tn)     # x streamed once per N tile
                + INp * OUTp * w_item * (Bp // tm)   # w streamed once per M tile
                + OUTp * b_item * (Bp // tm)
                + Bp * OUTp * o_item
            ),
            transcendentals=0,
        )

        y = pl.pallas_call(
            _linear_tiled_kernel,
            out_shape=jax.ShapeDtypeStruct((Bp, OUTp), out_dtype),
            grid_spec=pltpu.PrefetchScalarGridSpec(
                num_scalar_prefetch=0,
                grid=grid,
                in_specs=[
                    pl.BlockSpec((tm, tk), lambda i, j, k: (i, k)),  # x tile
                    pl.BlockSpec((tk, tn), lambda i, j, k: (k, j)),  # w tile
                    pl.BlockSpec((1, tn), lambda i, j, k: (0, j)),   # bias row
                ],
                out_specs=pl.BlockSpec((tm, tn), lambda i, j, k: (i, j)),
                scratch_shapes=[pltpu.VMEM((tm, tn), jnp.float32)],
            ),
            compiler_params=pltpu.CompilerParams(
                dimension_semantics=("parallel", "parallel", "arbitrary"),
                vmem_limit_bytes=vmem_limit,
            ),
            cost_estimate=cost,
        )(x, w, b)

    # Strip padding back to the logical shape.
    if (Bp, OUTp) != (B, OUT):
        y = y[:B, :OUT]
    return y


if __name__ == "__main__":
    # Small, forward-consistent shapes: batch=8, in_dim=32, out_dim=16.
    B, IN_DIM, OUT_DIM = 8, 32, 16

    key = jax.random.PRNGKey(0)
    kx, kw, kb = jax.random.split(key, 3)

    x = jax.random.normal(kx, (B, IN_DIM), dtype=jnp.float32)

    # Deterministic synthetic parameters (PyTorch nn.Linear-style uniform init).
    bound = 1.0 / jnp.sqrt(IN_DIM)
    w_pt = jax.random.uniform(
        kw, (OUT_DIM, IN_DIM), minval=-bound, maxval=bound, dtype=jnp.float32
    )  # PyTorch layout [OUT, IN]
    b = jax.random.uniform(
        kb, (1, OUT_DIM), minval=-bound, maxval=bound, dtype=jnp.float32
    )

    # One-time parameter prep (hoisted out of the per-call path).
    w_p, b_p = prepare_params(w_pt, b)

    # Reference (same math as PyTorch nn.Linear).
    y_ref = x @ w_pt.T + b

    # Fast (single-block) path — the one the real head size takes.
    y_fast = jax.block_until_ready(
        prn_classification_head(x, w_p, b_p, out_dim=OUT_DIM)
    )
    assert y_fast.shape == (B, OUT_DIM)
    assert jnp.allclose(y_fast, y_ref, atol=1e-5, rtol=1e-5)

    # Tiled path — exercised as well so both kernels are validated on-device.
    y_tiled = jax.block_until_ready(
        prn_classification_head(x, w_p, b_p, out_dim=OUT_DIM, force_tiled=True)
    )
    assert y_tiled.shape == (B, OUT_DIM)
    assert jnp.allclose(y_tiled, y_ref, atol=1e-5, rtol=1e-5)

    print("KERNEL_OK")
</pallas_src>

<mosaic_0001>
module attributes {stable_mosaic.version = 11 : i64} {
  func.func @_linear_single_block_kernel(%arg0: memref<8x128xf32, #tpu.memory_space<vmem>>, %arg1: memref<128x128xf32, #tpu.memory_space<vmem>>, %arg2: memref<1x128xf32, #tpu.memory_space<vmem>>, %arg3: memref<8x128xf32, #tpu.memory_space<vmem>>) attributes {dimension_semantics = [], scalar_prefetch = 0 : i64, scratch_operands = 0 : i64, tpu.core_type = #tpu.core_type<tc>} {
    %c0 = arith.constant 0 : index
    %c0_0 = arith.constant 0 : index
    %0 = vector.load %arg0[%c0, %c0_0] : memref<8x128xf32, #tpu.memory_space<vmem>>, vector<8x128xf32>
    %c0_1 = arith.constant 0 : index
    %c0_2 = arith.constant 0 : index
    %1 = vector.load %arg1[%c0_1, %c0_2] : memref<128x128xf32, #tpu.memory_space<vmem>>, vector<128x128xf32>
    %cst = arith.constant dense<0.000000e+00> : vector<8x128xf32>
    %2 = tpu.matmul %0, %1, %cst {dimension_numbers = #tpu.dot_dimension_numbers<[1], [0], [0], [1], [0, 0, 1, 1], [], []>} : vector<8x128xf32>, vector<128x128xf32>, vector<8x128xf32> -> vector<8x128xf32>
    %c0_3 = arith.constant 0 : index
    %c0_4 = arith.constant 0 : index
    %3 = vector.load %arg2[%c0_3, %c0_4] : memref<1x128xf32, #tpu.memory_space<vmem>>, vector<1x128xf32>
    %4 = vector.broadcast %3 : vector<1x128xf32> to vector<8x128xf32>
    %5 = arith.addf %2, %4 : vector<8x128xf32>
    %c0_5 = arith.constant 0 : index
    %c0_6 = arith.constant 0 : index
    %6 = vector.load %arg3[%c0_5, %c0_6] : memref<8x128xf32, #tpu.memory_space<vmem>>, vector<8x128xf32>
    tpu.vector_store %arg3[%c0_5, %c0_6], %5 {strides = array<i32>} : memref<8x128xf32, #tpu.memory_space<vmem>>, vector<8x128xf32>,
    return
  }
}

</mosaic_0001>

<llo_original>
// kernel: tpu_custom_call.1
$region0: #{tpu_custom_call.1}
  #allocation0 [shape = 'u32[]', space=smem, size = 0x4, offset = 0x4, fixed_abs, tag = 'smem constant byte address 0x4 - core index']
  #allocation1 [shape = 'u32[144,128]{1,0:T(1,128)}', space=vmem, size = 0x12000, scoped, tag = 'internal scratch']
  %s0 = inlined_call_operand.hbm [shape: f32[8,128], index: 0, kind: input, shape index: {}]
  %s1 = inlined_call_operand.hbm [shape: f32[128,128], index: 1, kind: input, shape index: {}]
  %s2 = inlined_call_operand.vmem [shape: f32[1,128], index: 2, kind: input, shape index: {}]
  %s3 = inlined_call_operand.hbm [shape: f32[8,128], index: 3, kind: output, shape index: {}]
  %s4 = sld [smem:[#allocation0]]
  $region30: #{tpu_custom_call.1} parent=0
    _
  %s6 = ssub.s32 1, %s4
  %s7 = scalar_select 0, %s6, %s4
  $region1: #{tpu_custom_call.1} parent=0
    #allocation2 [shape = 'u8[4096]{0}', space=vmem, size = 0x1000, scoped, tag = 'input window, operand 0, single buffered']
    #allocation3 [shape = 's32[1]{0}', space=sflag, size = 0x4, scoped, tag = 'scoped memory for tpu_custom_call.1']
    #allocation4 [shape = 's32[1]{0}', space=sflag, size = 0x4, scoped, tag = 'scoped memory for tpu_custom_call.1']
    #allocation5 [shape = 'u8[65536]{0}', space=vmem, size = 0x10000, scoped, tag = 'input window, operand 1, single buffered']
    #allocation6 [shape = 's32[1]{0}', space=sflag, size = 0x4, scoped, tag = 'scoped memory for tpu_custom_call.1']
    #allocation7 [shape = 'u8[4096]{0}', space=vmem, size = 0x1000, scoped, tag = 'output window, operand 0, single buffered']
    %8 = vsyncpa [#allocation3], 0
    %9 = vsyncpa [#allocation6], 0
    %10 = vsyncpa [#allocation4], 0
    // Predicated region
    $region2: #{tpu_custom_call.1} parent=1 // pred_check
      _
    $region3: #{tpu_custom_call.1} parent=1 // pred_check_branch
      %12 = sbr.rel (0) target = $region5
    $region4: #{tpu_custom_call.1} parent=1 // pred_region
      %s14 = ssub.s32 128, 128
      %15 = vsyncadd [#allocation3], %s14
      %s17 = sshll.u32 [#allocation2], 4
      %s18 = int_to_ptr.vmem [resolvable:$true] %s17
      %20 = dma.hbm_to_vmem [thread:$0]  %s0, 128, %s18, [#allocation3]
    $region5: #{tpu_custom_call.1} parent=1 // pred_fallthru
      _
    // Predicated region
    $region6: #{tpu_custom_call.1} parent=1 // pred_check
      _
    $region7: #{tpu_custom_call.1} parent=1 // pred_check_branch
      %22 = sbr.rel (0) target = $region9
    $region8: #{tpu_custom_call.1} parent=1 // pred_region
      %s24 = ssub.s32 2048, 2048
      %25 = vsyncadd [#allocation6], %s24
      %s26 = sshll.u32 [#allocation5], 4
      %s27 = int_to_ptr.vmem [resolvable:$true] %s26
      %32 = dma.hbm_to_vmem [thread:$0]  %s1, 2048, %s27, [#allocation6], 128, 128, 8
    $region9: #{tpu_custom_call.1} parent=1 // pred_fallthru
      _
    // Predicated region
    $region10: #{tpu_custom_call.1} parent=1 // pred_check
      _
    $region11: #{tpu_custom_call.1} parent=1 // pred_check_branch
      %34 = sbr.rel (0) target = $region13
    $region12: #{tpu_custom_call.1} parent=1 // pred_region
      _
    $region13: #{tpu_custom_call.1} parent=1 // pred_fallthru
      _
    // Predicated region
    $region14: #{tpu_custom_call.1} parent=1 // pred_check
      _
    $region15: #{tpu_custom_call.1} parent=1 // pred_check_branch
      %36 = sbr.rel (0) target = $region17
    $region16: #{tpu_custom_call.1} parent=1 // pred_region
      %37 = dma.done [#allocation3], 128
    $region17: #{tpu_custom_call.1} parent=1 // pred_fallthru
      _
    // Predicated region
    $region18: #{tpu_custom_call.1} parent=1 // pred_check
      _
    $region19: #{tpu_custom_call.1} parent=1 // pred_check_branch
      %39 = sbr.rel (0) target = $region21
    $region20: #{tpu_custom_call.1} parent=1 // pred_region
      %40 = dma.done [#allocation6], 2048
    $region21: #{tpu_custom_call.1} parent=1 // pred_fallthru
      _
    %v41 = vld [vmem:[#allocation2] sm:$0xff]
    %v42 = vld [vmem:[#allocation5] sm:$0xff]
    %v43 = vld [vmem:[#allocation5 + $0x8] sm:$0xff]
    %v44 = vld [vmem:[#allocation5 + $0x10] sm:$0xff]
    %v45 = vld [vmem:[#allocation5 + $0x18] sm:$0xff]
    %v46 = vld [vmem:[#allocation5 + $0x20] sm:$0xff]
    %v47 = vld [vmem:[#allocation5 + $0x28] sm:$0xff]
    %v48 = vld [vmem:[#allocation5 + $0x30] sm:$0xff]
    %v49 = vld [vmem:[#allocation5 + $0x38] sm:$0xff]
    %v50 = vld [vmem:[#allocation5 + $0x40] sm:$0xff]
    %v51 = vld [vmem:[#allocation5 + $0x48] sm:$0xff]
    %v52 = vld [vmem:[#allocation5 + $0x50] sm:$0xff]
    %v53 = vld [vmem:[#allocation5 + $0x58] sm:$0xff]
    %v54 = vld [vmem:[#allocation5 + $0x60] sm:$0xff]
    %v55 = vld [vmem:[#allocation5 + $0x68] sm:$0xff]
    %v56 = vld [vmem:[#allocation5 + $0x70] sm:$0xff]
    %v57 = vld [vmem:[#allocation5 + $0x78] sm:$0xff]
    %v58 = vld [vmem:[%s2] sm:$0x1]
    %v60 = vlaneseq
    %v61 = vshrl.u32 %v60, 7
    %v62 = vsub.s32 0, %v61
    %v63 = vrot.slane %v58, %v62
    %65 = vmatprep.subr.mxu0 0.0
    %66 = vmatpush1.msra.mxu0 %v42
    %67 = vmatprep.subr.mxu0 0.0
    %68 = vmatpush1.msra.mxu0 %v43
    %69 = vmatprep.subr.mxu0 0.0
    %70 = vmatpush1.msra.mxu0 %v44
    %71 = vmatprep.subr.mxu0 0.0
    %72 = vmatpush1.msra.mxu0 %v45
    %73 = vmatprep.subr.mxu0 0.0
    %74 = vmatpush1.msra.mxu0 %v46
    %75 = vmatprep.subr.mxu0 0.0
    %76 = vmatpush1.msra.mxu0 %v47
    %77 = vmatprep.subr.mxu0 0.0
    %78 = vmatpush1.msra.mxu0 %v48
    %79 = vmatprep.subr.mxu0 0.0
    %80 = vmatpush1.msra.mxu0 %v49
    %81 = vmatprep.subr.mxu0 0.0
    %82 = vmatpush1.msra.mxu0 %v50
    %83 = vmatprep.subr.mxu0 0.0
    %84 = vmatpush1.msra.mxu0 %v51
    %85 = vmatprep.subr.mxu0 0.0
    %86 = vmatpush1.msra.mxu0 %v52
    %87 = vmatprep.subr.mxu0 0.0
    %88 = vmatpush1.msra.mxu0 %v53
    %89 = vmatprep.subr.mxu0 0.0
    %90 = vmatpush1.msra.mxu0 %v54
    %91 = vmatprep.subr.mxu0 0.0
    %92 = vmatpush1.msra.mxu0 %v55
    %93 = vmatprep.subr.mxu0 0.0
    %94 = vmatpush1.msra.mxu0 %v56
    %95 = vmatprep.subr.mxu0 0.0
    %96 = vmatpush1.msra.mxu0 %v57
    %97 = vmatprep.subr.mxu0 0.0
    %98 = vmatpush1.msra.mxu0 0.0
    %99 = vmatprep.subr.mxu0 0.0
    %100 = vmatpush1.msra.mxu0 0.0
    %101 = vmatprep.subr.mxu0 0.0
    %102 = vmatpush1.msra.mxu0 0.0
    %103 = vmatprep.subr.mxu0 0.0
    %104 = vmatpush1.msra.mxu0 0.0
    %105 = vmatprep.subr.mxu0 0.0
    %106 = vmatpush1.msra.mxu0 0.0
    %107 = vmatprep.subr.mxu0 0.0
    %108 = vmatpush1.msra.mxu0 0.0
    %109 = vmatprep.subr.mxu0 0.0
    %110 = vmatpush1.msra.mxu0 0.0
    %111 = vmatprep.subr.mxu0 0.0
    %112 = vmatpush1.msra.mxu0 0.0
    %113 = vmatprep.subr.mxu0 0.0
    %114 = vmatpush1.msra.mxu0 0.0
    %115 = vmatprep.subr.mxu0 0.0
    %116 = vmatpush1.msra.mxu0 0.0
    %117 = vmatprep.subr.mxu0 0.0
    %118 = vmatpush1.msra.mxu0 0.0
    %119 = vmatprep.subr.mxu0 0.0
    %120 = vmatpush1.msra.mxu0 0.0
    %121 = vmatprep.subr.mxu0 0.0
    %122 = vmatpush1.msra.mxu0 0.0
    %123 = vmatprep.subr.mxu0 0.0
    %124 = vmatpush1.msra.mxu0 0.0
    %125 = vmatprep.subr.mxu0 0.0
    %126 = vmatpush1.msra.mxu0 0.0
    %127 = vmatprep.subr.mxu0 0.0
    %128 = vmatpush1.msra.mxu0 0.0
    %129 = vmatprep.mubr.f32.mxu0 0.0
    %130 = vmatmul.mubr.f32.gmra.mrb[0].mxu0 %v41
    %v131 = vpop.f32.mrb[0].mxu0
    %v132 = vadd.f32 %v63, %v131
    %v133 = vpop.f32.mrb[0].mxu0
    %134 = vdwg.mxu0
    %135 = vst [vmem:[#allocation7] sm:$0xff] %v132
    // Predicated region
    $region22: #{tpu_custom_call.1} parent=1 // pred_check
      _
    $region23: #{tpu_custom_call.1} parent=1 // pred_check_branch
      %137 = sbr.rel (0) target = $region25
    $region24: #{tpu_custom_call.1} parent=1 // pred_region
      %s139 = ssub.s32 128, 128
      %140 = vsyncadd [#allocation4], %s139
      %s142 = sshll.u32 [#allocation7], 4
      %s143 = int_to_ptr.vmem [resolvable:$true] %s142
      %145 = dma.vmem_to_hbm [thread:$0]  %s143, 128, %s3, [#allocation4]
    $region25: #{tpu_custom_call.1} parent=1 // pred_fallthru
      _
    // Predicated region
    $region26: #{tpu_custom_call.1} parent=1 // pred_check
      _
    $region27: #{tpu_custom_call.1} parent=1 // pred_check_branch
      %147 = sbr.rel (0) target = $region29
    $region28: #{tpu_custom_call.1} parent=1 // pred_region
      %148 = dma.done [#allocation4], 128
    $region29: #{tpu_custom_call.1} parent=1 // pred_fallthru
      _
    %149 = vsyncpa [#allocation3], 1
    %150 = vsyncpa [#allocation6], 1
    %151 = vsyncpa [#allocation4], 1

</llo_original>
